<compile_context>
chip_gen: v7x
topology: tpu7x:2x2x1
jax: 0.10.0
libtpu: 0.0.40
codegen_flags: <defaults>
</compile_context>

<pallas_src>
import math

import jax
import jax.numpy as jnp
from jax import lax
from jax.experimental import pallas as pl
from jax.experimental.pallas import tpu as pltpu

_LANES = 128
_SUBLANES = 8


def _round_up(x, m):
    return (x + m - 1) // m * m


def _cdiv(a, b):
    return -(-a // b)


def _min_row_multiple(dtype):
    # sublane packing: f32 -> 8, bf16/f16 -> 16, int8/bool -> 32
    return {4: 8, 2: 16, 1: 32}.get(jnp.dtype(dtype).itemsize, 8)


def _make_dice_partials_kernel(*, full_rows, rem, rt, chunk, n_steps,
                               needs_mask):
    """Build the partial-sums kernel for static (full_rows, rem, rt, ...)."""
    n_chunks = rt // chunk
    tiles = chunk // _SUBLANES

    def kernel(pr_ref, gt_ref, acc_ref):
        p = pl.program_id(0)   # outer "parallel" axis (per-core partials)
        s = pl.program_id(1)   # inner "arbitrary" reduction axis

        @pl.when(s == 0)
        def _():
            acc_ref[...] = jnp.zeros_like(acc_ref)

        # Logical (unclamped) first row of this grid block.
        block_row0 = (p * n_steps + s) * rt

        def accumulate(masked):
            def chunk_body(c, carry):
                tp_a, sp_a, sg_a = carry
                r0 = pl.multiple_of(c * chunk, chunk)
                pr = pr_ref[pl.ds(r0, chunk), :].astype(jnp.float32)
                gt = gt_ref[pl.ds(r0, chunk), :].astype(jnp.float32)
                # sigmoid(x) == 0.5 * (tanh(0.5*x) + 1): one EUP op + 2 VALU.
                pr = 0.5 * (jnp.tanh(0.5 * pr) + 1.0)
                if masked:
                    row = (block_row0 + r0 +
                           lax.broadcasted_iota(jnp.int32, (chunk, _LANES), 0))
                    valid = row < full_rows
                    if rem:
                        lane = lax.broadcasted_iota(jnp.int32,
                                                    (chunk, _LANES), 1)
                        valid = valid | ((row == full_rows) & (lane < rem))
                    pr = jnp.where(valid, pr, 0.0)
                    gt = jnp.where(valid, gt, 0.0)
                # Fold the chunk into (tiles, 8, 128) and reduce the leading
                # axis with plain VPU adds; the cross-lane reduce is deferred
                # to the wrapper (runs once on tiny partials).
                tp_a = tp_a + (gt * pr).reshape(tiles, _SUBLANES,
                                                _LANES).sum(axis=0)
                sp_a = sp_a + pr.reshape(tiles, _SUBLANES, _LANES).sum(axis=0)
                sg_a = sg_a + gt.reshape(tiles, _SUBLANES, _LANES).sum(axis=0)
                return tp_a, sp_a, sg_a

            z = jnp.zeros((_SUBLANES, _LANES), jnp.float32)
            tp_a, sp_a, sg_a = lax.fori_loop(
                0, n_chunks, chunk_body, (z, z, z),
                unroll=min(n_chunks, 4))
            acc_ref[0, 0, :, :] += tp_a
            acc_ref[0, 1, :, :] += sp_a
            acc_ref[0, 2, :, :] += sg_a

        if not needs_mask:
            accumulate(False)
        else:
            # Fast (unmasked) path for fully in-bounds blocks; masked path only
            # runs for the boundary / over-coverage block(s).
            @pl.when(block_row0 + rt <= full_rows)
            def _():
                accumulate(False)

            @pl.when(block_row0 + rt > full_rows)
            def _():
                accumulate(True)

    return kernel


def dice_loss(y_pr, y_gt, *, eps=1e-7, beta=1.0, row_tile=2048):
    """Dice loss over NCHW logits / targets. Returns a scalar f32."""
    assert y_pr.shape == y_gt.shape
    total = math.prod(y_pr.shape)

    pr_flat = y_pr.reshape(-1)   # free reshape of contiguous array
    gt_flat = y_gt.reshape(-1)

    full_rows = total // _LANES      # number of fully-valid 128-lane rows
    rem = total % _LANES             # valid lanes in the last (partial) row
    if rem:
        # TODO(synk): totals not divisible by 128 still pay one (<128-element)
        # zero-pad copy; a fully copy-free path would need 1-D blocks or
        # manual DMA. The padded elements are masked out inside the kernel,
        # so any input dtype (incl. fp8) stays correct.
        pad = _LANES - rem
        pr_flat = jnp.concatenate(
            [pr_flat, jnp.zeros((pad,), dtype=pr_flat.dtype)])
        gt_flat = jnp.concatenate(
            [gt_flat, jnp.zeros((pad,), dtype=gt_flat.dtype)])
    rows_arr = full_rows + (1 if rem else 0)

    sub = max(_min_row_multiple(y_pr.dtype), _min_row_multiple(y_gt.dtype),
              _SUBLANES)

    # Tiling: 2-way per-core split for anything non-tiny (both TCs on v7x,
    # harmless on v5e/v6e); tile up to `row_tile` rows (1 MiB/input in f32)
    # but keep >= ~4 grid steps per core so the DMA pipeline stays full.
    n_par = 1 if rows_arr <= 512 else 2
    min_steps = 4
    q = _LANES if rows_arr >= _LANES else sub   # rt quantum (chunk-friendly)
    rt = max(q, min(_round_up(row_tile, q),
                    _round_up(_cdiv(rows_arr, n_par * min_steps), q)))
    chunk = min(_LANES, rt)                     # rows per fused inner chunk
    nb = _cdiv(rows_arr, rt)                    # blocks actually needed
    n_steps = _cdiv(nb, n_par)                  # steps per core
    needs_mask = n_par * n_steps * rt > full_rows

    # Stream the original (possibly narrow) dtypes; widen in-register.
    pr2d = pr_flat.reshape(rows_arr, _LANES)
    gt2d = gt_flat.reshape(rows_arr, _LANES)

    # Clamp block indices so over-coverage blocks never DMA out of bounds;
    # their contribution is zeroed by the in-kernel mask.
    if n_par * n_steps > nb:
        in_idx = lambda p, s: (jnp.minimum(p * n_steps + s, nb - 1), 0)
    else:
        in_idx = lambda p, s: (p * n_steps + s, 0)

    kernel = _make_dice_partials_kernel(
        full_rows=full_rows, rem=rem, rt=rt, chunk=chunk,
        n_steps=n_steps, needs_mask=needs_mask)

    in_bytes = (jnp.dtype(y_pr.dtype).itemsize +
                jnp.dtype(y_gt.dtype).itemsize) * total
    cost = pl.CostEstimate(
        flops=8 * total,
        transcendentals=total,
        bytes_accessed=in_bytes + n_par * 3 * _SUBLANES * _LANES * 4)

    partials = pl.pallas_call(
        kernel,
        out_shape=jax.ShapeDtypeStruct((n_par, 3, _SUBLANES, _LANES),
                                       jnp.float32),
        grid_spec=pltpu.PrefetchScalarGridSpec(
            num_scalar_prefetch=0,
            grid=(n_par, n_steps),
            in_specs=[
                pl.BlockSpec((rt, _LANES), in_idx),
                pl.BlockSpec((rt, _LANES), in_idx),
            ],
            # Output block index depends only on p -> resident accumulator
            # across the inner "arbitrary" axis; one block per core on v7x.
            out_specs=pl.BlockSpec((1, 3, _SUBLANES, _LANES),
                                   lambda p, s: (p, 0, 0, 0)),
        ),
        compiler_params=pltpu.CompilerParams(
            dimension_semantics=("parallel", "arbitrary"),
        ),
        cost_estimate=cost,
    )(pr2d, gt2d)

    # Final cross-lane reduce + 5-flop dice formula on tiny partials (cheap).
    sums = jnp.sum(partials, axis=(0, 2, 3))  # (3,) = [tp, sum_pr, sum_gt]
    tp, sum_pr, sum_gt = sums[0], sums[1], sums[2]
    fp = sum_pr - tp
    fn = sum_gt - tp
    beta2 = jnp.float32(beta * beta)
    eps_f = jnp.float32(eps)
    score = ((1.0 + beta2) * tp + eps_f) / (
        (1.0 + beta2) * tp + beta2 * fn + fp + eps_f)
    return jnp.float32(1.0) - score


def _dice_loss_ref(y_pr, y_gt, eps=1e-7, beta=1.0):
    pr = jax.nn.sigmoid(y_pr.astype(jnp.float32))
    gt = y_gt.astype(jnp.float32)
    tp = jnp.sum(gt * pr)
    fp = jnp.sum(pr) - tp
    fn = jnp.sum(gt) - tp
    beta2 = beta * beta
    score = ((1 + beta2) * tp + eps) / ((1 + beta2) * tp + beta2 * fn + fp + eps)
    return 1.0 - score


if __name__ == "__main__":
    key = jax.random.PRNGKey(0)
    k1, k2, k3, k4, k5, k6 = jax.random.split(key, 6)

    # Primary demo: NCHW batch=2, channels=4, spatial=16x16 (no masking path).
    y_pr = jax.random.normal(k1, (2, 4, 16, 16), dtype=jnp.float32)   # logits
    y_gt = (jax.random.uniform(k2, (2, 4, 16, 16)) > 0.5).astype(jnp.float32)
    loss = jax.block_until_ready(dice_loss(y_pr, y_gt))
    ref = _dice_loss_ref(y_pr, y_gt)
    assert jnp.allclose(loss, ref, atol=1e-5, rtol=1e-5), (loss, ref)

    # Odd total (not a multiple of 128): exercises minimal pad + lane masking.
    y_pr1 = jax.random.normal(k3, (2, 3, 101, 67), dtype=jnp.float32)
    y_gt1 = (jax.random.uniform(k4, (2, 3, 101, 67)) > 0.5).astype(jnp.float32)
    loss1 = jax.block_until_ready(dice_loss(y_pr1, y_gt1))
    ref1 = _dice_loss_ref(y_pr1, y_gt1)
    assert jnp.allclose(loss1, ref1, atol=1e-5, rtol=1e-5), (loss1, ref1)

    # Larger input: 2-way per-core partials, clamped + masked boundary blocks.
    y_pr2 = jax.random.normal(k5, (2, 4, 160, 160), dtype=jnp.float32)
    y_gt2 = (jax.random.uniform(k6, (2, 4, 160, 160)) > 0.5).astype(jnp.float32)
    loss2 = jax.block_until_ready(dice_loss(y_pr2, y_gt2))
    ref2 = _dice_loss_ref(y_pr2, y_gt2)
    assert jnp.allclose(loss2, ref2, atol=1e-5, rtol=1e-5), (loss2, ref2)

    print("KERNEL_OK")
</pallas_src>

<mosaic_0001>
module attributes {stable_mosaic.version = 11 : i64} {
  func.func @kernel(%arg0: i32, %arg1: i32, %arg2: memref<8x128xf32, #tpu.memory_space<vmem>>, %arg3: memref<8x128xf32, #tpu.memory_space<vmem>>, %arg4: memref<1x3x8x128xf32, #tpu.memory_space<vmem>>) attributes {dimension_semantics = [#tpu.dimension_semantics<parallel>, #tpu.dimension_semantics<arbitrary>], iteration_bounds = array<i64: 1, 2>, scalar_prefetch = 0 : i64, scratch_operands = 0 : i64, tpu.core_type = #tpu.core_type<tc>, window_params = [{transform_indices = @transform_0, window_bounds = array<i64: 8, 128>}, {transform_indices = @transform_1, window_bounds = array<i64: 8, 128>}, {transform_indices = @transform_2, window_bounds = array<i64: 1, 3, 8, 128>}]} {
    %c0_i32 = arith.constant 0 : i32
    %0 = arith.cmpi eq, %arg1, %c0_i32 : i32
    %1 = arith.extui %0 : i1 to i32
    %c0_i32_0 = arith.constant 0 : i32
    %2 = arith.cmpi ne, %1, %c0_i32_0 : i32
    scf.if %2 {
      %cst_31 = arith.constant 0.000000e+00 : f32
      %45 = vector.broadcast %cst_31 : f32 to vector<1x3x8x128xf32>
      %c0_32 = arith.constant 0 : index
      %c0_33 = arith.constant 0 : index
      %c0_34 = arith.constant 0 : index
      %c0_35 = arith.constant 0 : index
      %46 = vector.load %arg4[%c0_32, %c0_33, %c0_34, %c0_35] : memref<1x3x8x128xf32, #tpu.memory_space<vmem>>, vector<1x3x8x128xf32>
      tpu.vector_store %arg4[%c0_32, %c0_33, %c0_34, %c0_35], %45 {strides = array<i32>} : memref<1x3x8x128xf32, #tpu.memory_space<vmem>>, vector<1x3x8x128xf32>,
    } else {
    }
    %cst = arith.constant 0.000000e+00 : f32
    %3 = vector.broadcast %cst : f32 to vector<8x128xf32>
    %c0_i32_1 = arith.constant 0 : i32
    %c8_i32 = arith.constant 8 : i32
    %4 = arith.muli %c0_i32_1, %c8_i32 : i32
    %5 = tpu.assume_multiple %4, 8 : i32
    %6 = arith.index_cast %5 : i32 to index
    %c0 = arith.constant 0 : index
    %7 = vector.load %arg2[%6, %c0] : memref<8x128xf32, #tpu.memory_space<vmem>>, vector<8x128xf32>
    %8 = arith.index_cast %5 : i32 to index
    %c0_2 = arith.constant 0 : index
    %9 = vector.load %arg3[%8, %c0_2] : memref<8x128xf32, #tpu.memory_space<vmem>>, vector<8x128xf32>
    %cst_3 = arith.constant 5.000000e-01 : f32
    %10 = vector.broadcast %cst_3 : f32 to vector<8x128xf32>
    %11 = arith.mulf %10, %7 : vector<8x128xf32>
    %12 = math.tanh %11 : vector<8x128xf32>
    %cst_4 = arith.constant 1.000000e+00 : f32
    %13 = vector.broadcast %cst_4 : f32 to vector<8x128xf32>
    %14 = arith.addf %12, %13 : vector<8x128xf32>
    %cst_5 = arith.constant 5.000000e-01 : f32
    %15 = vector.broadcast %cst_5 : f32 to vector<8x128xf32>
    %16 = arith.mulf %15, %14 : vector<8x128xf32>
    %17 = arith.mulf %9, %16 : vector<8x128xf32>
    %18 = vector.shape_cast %17 : vector<8x128xf32> to vector<1x8x128xf32>
    %cst_6 = arith.constant dense<0.000000e+00> : vector<8x128xf32>
    %19 = vector.multi_reduction <add>, %18, %cst_6 [0] : vector<1x8x128xf32> to vector<8x128xf32>
    %20 = arith.addf %3, %19 : vector<8x128xf32>
    %21 = vector.shape_cast %16 : vector<8x128xf32> to vector<1x8x128xf32>
    %cst_7 = arith.constant dense<0.000000e+00> : vector<8x128xf32>
    %22 = vector.multi_reduction <add>, %21, %cst_7 [0] : vector<1x8x128xf32> to vector<8x128xf32>
    %23 = arith.addf %3, %22 : vector<8x128xf32>
    %24 = vector.shape_cast %9 : vector<8x128xf32> to vector<1x8x128xf32>
    %cst_8 = arith.constant dense<0.000000e+00> : vector<8x128xf32>
    %25 = vector.multi_reduction <add>, %24, %cst_8 [0] : vector<1x8x128xf32> to vector<8x128xf32>
    %26 = arith.addf %3, %25 : vector<8x128xf32>
    %c1_i32 = arith.constant 1 : i32
    %c0_9 = arith.constant 0 : index
    %c0_10 = arith.constant 0 : index
    %c0_11 = arith.constant 0 : index
    %c0_12 = arith.constant 0 : index
    %27 = vector.load %arg4[%c0_9, %c0_10, %c0_11, %c0_12] : memref<1x3x8x128xf32, #tpu.memory_space<vmem>>, vector<1x1x8x128xf32>
    %28 = vector.shape_cast %27 : vector<1x1x8x128xf32> to vector<8x128xf32>
    %29 = arith.addf %28, %20 : vector<8x128xf32>
    %c0_13 = arith.constant 0 : index
    %c0_14 = arith.constant 0 : index
    %c0_15 = arith.constant 0 : index
    %c0_16 = arith.constant 0 : index
    %30 = vector.load %arg4[%c0_13, %c0_14, %c0_15, %c0_16] : memref<1x3x8x128xf32, #tpu.memory_space<vmem>>, vector<1x1x8x128xf32>
    %31 = vector.shape_cast %30 : vector<1x1x8x128xf32> to vector<8x128xf32>
    %32 = vector.shape_cast %29 : vector<8x128xf32> to vector<1x1x8x128xf32>
    tpu.vector_store %arg4[%c0_13, %c0_14, %c0_15, %c0_16], %32 {strides = array<i32>} : memref<1x3x8x128xf32, #tpu.memory_space<vmem>>, vector<1x1x8x128xf32>,
    %c0_17 = arith.constant 0 : index
    %c1 = arith.constant 1 : index
    %c0_18 = arith.constant 0 : index
    %c0_19 = arith.constant 0 : index
    %33 = vector.load %arg4[%c0_17, %c1, %c0_18, %c0_19] : memref<1x3x8x128xf32, #tpu.memory_space<vmem>>, vector<1x1x8x128xf32>
    %34 = vector.shape_cast %33 : vector<1x1x8x128xf32> to vector<8x128xf32>
    %35 = arith.addf %34, %23 : vector<8x128xf32>
    %c0_20 = arith.constant 0 : index
    %c1_21 = arith.constant 1 : index
    %c0_22 = arith.constant 0 : index
    %c0_23 = arith.constant 0 : index
    %36 = vector.load %arg4[%c0_20, %c1_21, %c0_22, %c0_23] : memref<1x3x8x128xf32, #tpu.memory_space<vmem>>, vector<1x1x8x128xf32>
    %37 = vector.shape_cast %36 : vector<1x1x8x128xf32> to vector<8x128xf32>
    %38 = vector.shape_cast %35 : vector<8x128xf32> to vector<1x1x8x128xf32>
    tpu.vector_store %arg4[%c0_20, %c1_21, %c0_22, %c0_23], %38 {strides = array<i32>} : memref<1x3x8x128xf32, #tpu.memory_space<vmem>>, vector<1x1x8x128xf32>,
    %c0_24 = arith.constant 0 : index
    %c2 = arith.constant 2 : index
    %c0_25 = arith.constant 0 : index
    %c0_26 = arith.constant 0 : index
    %39 = vector.load %arg4[%c0_24, %c2, %c0_25, %c0_26] : memref<1x3x8x128xf32, #tpu.memory_space<vmem>>, vector<1x1x8x128xf32>
    %40 = vector.shape_cast %39 : vector<1x1x8x128xf32> to vector<8x128xf32>
    %41 = arith.addf %40, %26 : vector<8x128xf32>
    %c0_27 = arith.constant 0 : index
    %c2_28 = arith.constant 2 : index
    %c0_29 = arith.constant 0 : index
    %c0_30 = arith.constant 0 : index
    %42 = vector.load %arg4[%c0_27, %c2_28, %c0_29, %c0_30] : memref<1x3x8x128xf32, #tpu.memory_space<vmem>>, vector<1x1x8x128xf32>
    %43 = vector.shape_cast %42 : vector<1x1x8x128xf32> to vector<8x128xf32>
    %44 = vector.shape_cast %41 : vector<8x128xf32> to vector<1x1x8x128xf32>
    tpu.vector_store %arg4[%c0_27, %c2_28, %c0_29, %c0_30], %44 {strides = array<i32>} : memref<1x3x8x128xf32, #tpu.memory_space<vmem>>, vector<1x1x8x128xf32>,
    return
  }
  func.func @transform_0(%arg0: i32, %arg1: i32) -> (i32, i32) {
    %c2_i32 = arith.constant 2 : i32
    %0 = arith.muli %arg0, %c2_i32 : i32
    %1 = arith.addi %0, %arg1 : i32
    %c0_i32 = arith.constant 0 : i32
    %c0_i32_0 = arith.constant 0 : i32
    return %1, %c0_i32 : i32, i32
  }
  func.func @transform_1(%arg0: i32, %arg1: i32) -> (i32, i32) {
    %c2_i32 = arith.constant 2 : i32
    %0 = arith.muli %arg0, %c2_i32 : i32
    %1 = arith.addi %0, %arg1 : i32
    %c0_i32 = arith.constant 0 : i32
    %c0_i32_0 = arith.constant 0 : i32
    return %1, %c0_i32 : i32, i32
  }
  func.func @transform_2(%arg0: i32, %arg1: i32) -> (i32, i32, i32, i32) {
    %c0_i32 = arith.constant 0 : i32
    %c0_i32_0 = arith.constant 0 : i32
    %c0_i32_1 = arith.constant 0 : i32
    %c0_i32_2 = arith.constant 0 : i32
    return %arg0, %c0_i32, %c0_i32_0, %c0_i32_1 : i32, i32, i32, i32
  }
}

</mosaic_0001>

<llo_original>
// kernel: tpu_custom_call.1
$region0: #{tpu_custom_call.1}
  #allocation0 [shape = 'u32[]', space=smem, size = 0x4, offset = 0x4, fixed_abs, tag = 'smem constant byte address 0x4 - core index']
  #allocation1 [shape = 'u32[144,128]{1,0:T(1,128)}', space=vmem, size = 0x12000, scoped, tag = 'internal scratch']
  %s0 = inlined_call_operand.hbm [shape: f32[16,128], index: 0, kind: input, shape index: {}]
  %s1 = inlined_call_operand.hbm [shape: f32[16,128], index: 1, kind: input, shape index: {}]
  %s2 = inlined_call_operand.hbm [shape: f32[1,3,8,128], index: 2, kind: output, shape index: {}]
  %s3 = sld [smem:[#allocation0]]
  $region53: #{tpu_custom_call.1} parent=0
    _
  %s5 = ssub.s32 1, %s3
  %s6 = scalar_select 0, %s5, %s3
  $region1: #{tpu_custom_call.1} parent=0
    #allocation2 [shape = 'u8[8192]{0}', space=vmem, size = 0x2000, scoped, tag = 'input window, operand 0']
    #allocation3 [shape = 's32[2]{0}', space=sflag, size = 0x8, scoped, tag = 'scoped memory for tpu_custom_call.1']
    #allocation4 [shape = 's32[2]{0}', space=sflag, size = 0x8, scoped, tag = 'scoped memory for tpu_custom_call.1']
    #allocation5 [shape = 'u8[8192]{0}', space=vmem, size = 0x2000, scoped, tag = 'input window, operand 1']
    #allocation6 [shape = 's32[2]{0}', space=sflag, size = 0x8, scoped, tag = 'scoped memory for tpu_custom_call.1']
    #allocation7 [shape = 'u8[12288]{0}', space=vmem, size = 0x3000, scoped, tag = 'output window, operand 0, single buffered']
    %7 = vsyncpa [#allocation3], 0
    %s8 = scalar_lea.sflag [#allocation3], 1
    %9 = vsyncpa %s8, 0
    %10 = vsyncpa [#allocation6], 0
    %s11 = scalar_lea.sflag [#allocation6], 1
    %12 = vsyncpa %s11, 0
    %13 = vsyncpa [#allocation4], 0
    loop: start=0, step=1, limit=4
    $region2: #{tpu_custom_call.1} parent=1 // loop_pre_header
      _
    $region3: #{tpu_custom_call.1} parent=1 // loop_header
      %s15 = sphi 0, %s19
      %p16 = scmp.ge.s32.totalorder %s15, 4
      %s22 = sphi 0, %s34
      %s23 = sphi 0, %s30
      %s24 = sphi 0, %s22
      %s25 = sphi 0, %s23
      %s26 = sphi 0, %s24
      %s27 = sphi 0, %s25
      %s41 = sphi 0, %s43
      %s44 = sphi 0, %s41
      %s45 = sphi 0, %s44
      %s61 = sphi 0, %s45
      %s71 = sphi 0, %s73
      %s74 = sphi 0, %s71
      %s75 = sphi 0, %s74
      %s91 = sphi 0, %s75
      %s97 = sphi 0, %s99
      %s100 = sphi 0, %s97
      %s101 = sphi 0, %s100
      %s117 = sphi 0, %s101
    $region4: #{tpu_custom_call.1} parent=1 // loop_header_branch
      %18 = sbr.rel (%p16) target = $region8
    $region5: #{tpu_custom_call.1} parent=1 // loop_body
      %s20 = ssub.s32 %s15, 1
      %s21 = ssub.s32 %s15, 2
      %s28 = sadd.s32 1, %s23
      %p29 = scmp.ge.s32.totalorder %s28, 2
      %s30 = scalar_select %p29, 0, %s28
      %s31 = sadd.s32 1, %s22
      %s32 = scalar_select %p29, %s31, %s22
      %p33 = scmp.ge.s32.totalorder %s32, 1
      %s34 = scalar_select %p33, 0, %s32
      %s35 = smul.u32 %s22, 2
      %s36 = sadd.s32 %s35, %s23
      %s37 = smul.u32 %s34, 2
      %s38 = sadd.s32 %s37, %s30
      %s39 = ssub.s32 %s36, %s38
      %p40 = scmp.eq.s32.totalorder %s39, 0
      %s42 = sadd.s32 %s41, 1
      %s43 = scalar_select %p40, %s41, %s42
      %p46 = pneg %p40
      %p47 = scmp.eq.s32.totalorder %s15, 1
      %p48 = por %p46, %p47
      %p49 = scmp.ne.s32.totalorder %s41, %s44
      %p50 = scmp.eq.s32.totalorder %s15, 0
      %p51 = por %p49, %p50
      %p52 = scmp.ne.s32.totalorder %s41, %s44
      %p53 = scmp.eq.s32.totalorder %s20, 1
      %p54 = por %p52, %p53
      %p55 = scmp.ne.s32.totalorder %s44, %s45
      %p56 = scmp.eq.s32.totalorder %s20, 0
      %p57 = por %p55, %p56
      %p58 = scmp.ne.s32.totalorder %s44, %s45
      %p59 = scmp.eq.s32.totalorder %s21, 1
      %p60 = por %p58, %p59
      %p62 = scmp.ne.s32.totalorder %s45, %s61
      %p63 = scmp.eq.s32.totalorder %s21, 0
      %p64 = por %p62, %p63
      %s65 = smul.u32 %s22, 2
      %s66 = sadd.s32 %s65, %s23
      %s67 = smul.u32 %s34, 2
      %s68 = sadd.s32 %s67, %s30
      %s69 = ssub.s32 %s66, %s68
      %p70 = scmp.eq.s32.totalorder %s69, 0
      %s72 = sadd.s32 %s71, 1
      %s73 = scalar_select %p70, %s71, %s72
      %p76 = pneg %p70
      %p77 = scmp.eq.s32.totalorder %s15, 1
      %p78 = por %p76, %p77
      %p79 = scmp.ne.s32.totalorder %s71, %s74
      %p80 = scmp.eq.s32.totalorder %s15, 0
      %p81 = por %p79, %p80
      %p82 = scmp.ne.s32.totalorder %s71, %s74
      %p83 = scmp.eq.s32.totalorder %s20, 1
      %p84 = por %p82, %p83
      %p85 = scmp.ne.s32.totalorder %s74, %s75
      %p86 = scmp.eq.s32.totalorder %s20, 0
      %p87 = por %p85, %p86
      %p88 = scmp.ne.s32.totalorder %s74, %s75
      %p89 = scmp.eq.s32.totalorder %s21, 1
      %p90 = por %p88, %p89
      %p92 = scmp.ne.s32.totalorder %s75, %s91
      %p93 = scmp.eq.s32.totalorder %s21, 0
      %p94 = por %p92, %p93
      %s95 = ssub.s32 %s22, %s34
      %p96 = scmp.eq.s32.totalorder %s95, 0
      %s98 = sadd.s32 %s97, 1
      %s99 = scalar_select %p96, %s97, %s98
      %p102 = pneg %p96
      %p103 = scmp.eq.s32.totalorder %s15, 1
      %p104 = por %p102, %p103
      %p105 = scmp.ne.s32.totalorder %s97, %s100
      %p106 = scmp.eq.s32.totalorder %s15, 0
      %p107 = por %p105, %p106
      %p108 = scmp.ne.s32.totalorder %s97, %s100
      %p109 = scmp.eq.s32.totalorder %s20, 1
      %p110 = por %p108, %p109
      %p111 = scmp.ne.s32.totalorder %s100, %s101
      %p112 = scmp.eq.s32.totalorder %s20, 0
      %p113 = por %p111, %p112
      %p114 = scmp.ne.s32.totalorder %s100, %s101
      %p115 = scmp.eq.s32.totalorder %s21, 1
      %p116 = por %p114, %p115
      %p118 = scmp.ne.s32.totalorder %s101, %s117
      %p119 = scmp.eq.s32.totalorder %s21, 0
      %p120 = por %p118, %p119
      %p121 = scmp.le.s32.totalorder 1, %s15
      %p122 = scmp.lt.s32.totalorder %s15, 3
      %p123 = pnand %p121, %p122
      %p124 = pneg %p123
      // Predicated region
      $region9: #{tpu_custom_call.1} parent=5 // pred_check
        _
      $region10: #{tpu_custom_call.1} parent=5 // pred_check_branch
        %126 = sbr.rel (%p123) target = $region12
      $region11: #{tpu_custom_call.1} parent=5 // pred_region
        %s127 = ssub.s32 %s15, 1
      $region12: #{tpu_custom_call.1} parent=5 // pred_fallthru
        _
      %p128 = scmp.lt.s32.totalorder %s15, 2
      // Predicated region
      $region13: #{tpu_custom_call.1} parent=5 // pred_check
        %p129 = pneg %p128
      $region14: #{tpu_custom_call.1} parent=5 // pred_check_branch
        %131 = sbr.rel (%p129) target = $region16
      $region15: #{tpu_custom_call.1} parent=5 // pred_region
        // Predicated region
        $region17: #{tpu_custom_call.1} parent=15 // pred_check
          %p132 = pneg %p51
        $region18: #{tpu_custom_call.1} parent=15 // pred_check_branch
          %134 = sbr.rel (%p132) target = $region20
        $region19: #{tpu_custom_call.1} parent=15 // pred_region
          %s135 = sand.u32 %s41, 1
          %s136 = scalar_lea.sflag [#allocation3], %s135
          %s137 = sand.u32 %s41, 1
          %s138 = smul.addr %s137, 8
          %s139 = scalar_lea.vmem [#allocation2], %s138
          %s140 = smul.u32 %s22, 2
          %s141 = sadd.s32 %s140, %s23
          %s143 = ssub.s32 128, 128
          %144 = vsyncadd %s136, %s143
          %s145 = smul.addr %s141, 128
          %s146 = scalar_lea.hbm %s0, %s145
          %s148 = sshll.u32 %s139, 4
          %s149 = int_to_ptr.vmem [resolvable:$true] %s148
          %151 = dma.hbm_to_vmem [thread:$0]  %s146, 128, %s149, %s136
        $region20: #{tpu_custom_call.1} parent=15 // pred_fallthru
          _
        // Predicated region
        $region21: #{tpu_custom_call.1} parent=15 // pred_check
          %p152 = pneg %p81
        $region22: #{tpu_custom_call.1} parent=15 // pred_check_branch
          %154 = sbr.rel (%p152) target = $region24
        $region23: #{tpu_custom_call.1} parent=15 // pred_region
          %s155 = sand.u32 %s71, 1
          %s156 = scalar_lea.sflag [#allocation6], %s155
          %s157 = sand.u32 %s71, 1
          %s158 = smul.addr %s157, 8
          %s159 = scalar_lea.vmem [#allocation5], %s158
          %s160 = smul.u32 %s22, 2
          %s161 = sadd.s32 %s160, %s23
          %s163 = ssub.s32 128, 128
          %164 = vsyncadd %s156, %s163
          %s165 = smul.addr %s161, 128
          %s166 = scalar_lea.hbm %s1, %s165
          %s168 = sshll.u32 %s159, 4
          %s169 = int_to_ptr.vmem [resolvable:$true] %s168
          %171 = dma.hbm_to_vmem [thread:$0]  %s166, 128, %s169, %s156
        $region24: #{tpu_custom_call.1} parent=15 // pred_fallthru
          _
      $region16: #{tpu_custom_call.1} parent=5 // pred_fallthru
        _
      %p172 = scmp.le.s32.totalorder 1, %s15
      %p173 = scmp.lt.s32.totalorder %s15, 3
      %p174 = pnand %p172, %p173
      %p175 = pneg %p174
      // Predicated region
      $region25: #{tpu_custom_call.1} parent=5 // pred_check
        _
      $region26: #{tpu_custom_call.1} parent=5 // pred_check_branch
        %177 = sbr.rel (%p174) target = $region28
      $region27: #{tpu_custom_call.1} parent=5 // pred_region
        %s178 = ssub.s32 %s15, 1
        %s179 = sand.u32 %s44, 1
        %s180 = scalar_lea.sflag [#allocation3], %s179
        %s181 = sand.u32 %s44, 1
        %s182 = smul.addr %s181, 8
        %s183 = scalar_lea.vmem [#allocation2], %s182
        // Predicated region
        $region29: #{tpu_custom_call.1} parent=27 // pred_check
          %p184 = pneg %p57
        $region30: #{tpu_custom_call.1} parent=27 // pred_check_branch
          %186 = sbr.rel (%p184) target = $region32
        $region31: #{tpu_custom_call.1} parent=27 // pred_region
          %187 = dma.done %s180, 128
        $region32: #{tpu_custom_call.1} parent=27 // pred_fallthru
          _
        %s188 = sand.u32 %s74, 1
        %s189 = scalar_lea.sflag [#allocation6], %s188
        %s190 = sand.u32 %s74, 1
        %s191 = smul.addr %s190, 8
        %s192 = scalar_lea.vmem [#allocation5], %s191
        // Predicated region
        $region33: #{tpu_custom_call.1} parent=27 // pred_check
          %p193 = pneg %p87
        $region34: #{tpu_custom_call.1} parent=27 // pred_check_branch
          %195 = sbr.rel (%p193) target = $region36
        $region35: #{tpu_custom_call.1} parent=27 // pred_region
          %196 = dma.done %s189, 128
        $region36: #{tpu_custom_call.1} parent=27 // pred_fallthru
          _
        %s197 = sand.u32 %s44, 1
        %s198 = scalar_lea.sflag [#allocation3], %s197
        %s199 = sand.u32 %s44, 1
        %s200 = smul.addr %s199, 8
        %s201 = scalar_lea.vmem [#allocation2], %s200
        %p202 = pneg %p57
        %p203 = pneg %p54
        %s204 = sand.u32 %s74, 1
        %s205 = scalar_lea.sflag [#allocation6], %s204
        %s206 = sand.u32 %s74, 1
        %s207 = smul.addr %s206, 8
        %s208 = scalar_lea.vmem [#allocation5], %s207
        %p209 = pneg %p87
        %p210 = pneg %p84
        %p211 = pneg %p113
        %p212 = pneg %p110
        %s213 = smul.u32 %s24, 2
        %s214 = sadd.s32 %s213, %s25
        %s215 = smul.u32 %s24, 2
        %s216 = sadd.s32 %s215, %s25
        %p217 = scmp.eq.s32.totalorder %s25, 0
        // Predicated region
        $region37: #{tpu_custom_call.1} parent=27 // pred_check
          %p218 = pneg %p217
        $region38: #{tpu_custom_call.1} parent=27 // pred_check_branch
          %220 = sbr.rel (%p218) target = $region40
        $region39: #{tpu_custom_call.1} parent=27 // pred_region
          %221 = vst [vmem:[#allocation7] sm:$0xff] 0.0
          %222 = vst [vmem:[#allocation7 + $0x8] sm:$0xff] 0.0
          %223 = vst [vmem:[#allocation7 + $0x10] sm:$0xff] 0.0
        $region40: #{tpu_custom_call.1} parent=27 // pred_fallthru
          _
        %v224 = vld [vmem:[%s183] sm:$0xff]
        %v225 = vld [vmem:[%s192] sm:$0xff]
        %v226 = vmul.f32 %v224, 0.5
        %v227 = vtanh.pop %v226
        %v228 = vadd.f32 %v227, 1.0
        %v229 = vmul.f32 %v228, 0.5
        %v230 = vmul.f32 %v225, %v229
        %v231 = vadd.f32 %v230, 0.0
        %v232 = vadd.f32 %v231, 0.0
        %v233 = vadd.f32 %v229, 0.0
        %v234 = vadd.f32 %v233, 0.0
        %v235 = vadd.f32 %v225, 0.0
        %v236 = vadd.f32 %v235, 0.0
        %v237 = vld [vmem:[#allocation7] sm:$0xff]
        %v238 = vadd.f32 %v237, %v232
        %239 = vst [vmem:[#allocation7] sm:$0xff] %v238
        %s240 = scalar_lea.vmem [#allocation7], 8
        %v241 = vld [vmem:[%s240] sm:$0xff]
        %v242 = vadd.f32 %v241, %v234
        %243 = vst [vmem:[%s240] sm:$0xff] %v242
        %s244 = scalar_lea.vmem [#allocation7], 16
        %v245 = vld [vmem:[%s244] sm:$0xff]
        %v246 = vadd.f32 %v245, %v236
        %247 = vst [vmem:[%s244] sm:$0xff] %v246
        // Predicated region
        $region41: #{tpu_custom_call.1} parent=27 // pred_check
          %p248 = pneg %p110
        $region42: #{tpu_custom_call.1} parent=27 // pred_check_branch
          %250 = sbr.rel (%p248) target = $region44
        $region43: #{tpu_custom_call.1} parent=27 // pred_region
          %s252 = ssub.s32 384, 384
          %253 = vsyncadd [#allocation4], %s252
          %s254 = smul.addr %s24, 3
          %s255 = smul.addr %s254, 128
          %s256 = scalar_lea.hbm %s2, %s255
          %s257 = sshll.u32 [#allocation7], 4
          %s258 = int_to_ptr.vmem [resolvable:$true] %s257
          %263 = dma.vmem_to_hbm [thread:$0]  %s258, 384, %s256, [#allocation4], 128, 128, 8
        $region44: #{tpu_custom_call.1} parent=27 // pred_fallthru
          _
        // Predicated region
        $region45: #{tpu_custom_call.1} parent=27 // pred_check
          %p264 = pneg %p110
        $region46: #{tpu_custom_call.1} parent=27 // pred_check_branch
          %266 = sbr.rel (%p264) target = $region48
        $region47: #{tpu_custom_call.1} parent=27 // pred_region
          %267 = dma.done [#allocation4], 384
        $region48: #{tpu_custom_call.1} parent=27 // pred_fallthru
          _
      $region28: #{tpu_custom_call.1} parent=5 // pred_fallthru
        _
      %p268 = scmp.le.s32.totalorder 2, %s15
      // Predicated region
      $region49: #{tpu_custom_call.1} parent=5 // pred_check
        %p269 = pneg %p268
      $region50: #{tpu_custom_call.1} parent=5 // pred_check_branch
        %271 = sbr.rel (%p269) target = $region52
      $region51: #{tpu_custom_call.1} parent=5 // pred_region
        %s272 = ssub.s32 %s15, 2
      $region52: #{tpu_custom_call.1} parent=5 // pred_fallthru
        _
    $region6: #{tpu_custom_call.1} parent=1 // loop_footer
      %s19 = sadd.s32 1, %s15
    $region7: #{tpu_custom_call.1} parent=1 // loop_footer_branch
      %14 = sbr.rel target = $region3
    $region8: #{tpu_custom_call.1} parent=1 // loop_exit
      _
    %273 = vsyncpa [#allocation3], 1
    %s274 = scalar_lea.sflag [#allocation3], 1
    %275 = vsyncpa %s274, 1
    %276 = vsyncpa [#allocation6], 1
    %s277 = scalar_lea.sflag [#allocation6], 1
    %278 = vsyncpa %s277, 1
    %279 = vsyncpa [#allocation4], 1
    %s280 = scalar_lea.sflag [#allocation4], 1
    %281 = vsyncpa %s280, 1

</llo_original>
